<compile_context>
chip_gen: v7x
topology: tpu7x:2x2x1
jax: 0.10.0
libtpu: 0.0.40
codegen_flags: <defaults>
</compile_context>

<pallas_src>
import jax
import jax.numpy as jnp
from jax.experimental import pallas as pl
from jax.experimental.pallas import tpu as pltpu


# ----------------------------------------------------------------------------
# Pallas kernel: one decoder step (attention + combine + GRU + output head)
# ----------------------------------------------------------------------------
def _decoder_attention_kernel(
    emb_ref, h0_ref, enc_ref,
    wa_e_ref, wa_h_ref, ba_ref,        # attentionLayer, split over [emb | hidden]
    wc_e_ref, wc_c_ref, bc_ref,        # attentionCombine, split over [emb | ctx]
    w_ih_ref, w_hh_ref,                # fused GRU gate weights (r|z|n along lanes)
    b_ih_ref, b_hh_ref,                # fused GRU gate biases (1, 3H)
    wo_ref, bo_ref,                    # output projection
    logp_ref, hnew_ref, attnw_ref,
):
    f32 = jnp.float32
    B, L = attnw_ref.shape
    H = hnew_ref.shape[-1]

    emb = emb_ref[...]                 # (B, E)
    h0 = h0_ref[...]                   # (B, H)

    # --- attention weights: softmax(Linear(cat(emb, h0))) -------------------
    # concat + matmul rewritten as sum of two matmuls (no in-kernel concat).
    logits = (jnp.dot(emb, wa_e_ref[...], preferred_element_type=f32)
              + jnp.dot(h0, wa_h_ref[...], preferred_element_type=f32)
              + ba_ref[...])                                       # (B, L)
    m = jnp.max(logits, axis=1, keepdims=True)
    e = jnp.exp(logits - m)
    inv_denom = pl.reciprocal(jnp.sum(e, axis=1, keepdims=True), approx=True)
    attn_w = e * inv_denom                                         # (B, L)
    attnw_ref[...] = attn_w

    # --- context: bmm((B,1,L), (B,L,H)) -> (B,H) on the MXU ------------------
    ctx = jnp.einsum(
        "bql,blh->bqh",
        attn_w.reshape(B, 1, L), enc_ref[...],
        preferred_element_type=f32)[:, 0, :]                       # (B, H)

    # --- attentionCombine + ReLU ---------------------------------------------
    x = (jnp.dot(emb, wc_e_ref[...], preferred_element_type=f32)
         + jnp.dot(ctx, wc_c_ref[...], preferred_element_type=f32)
         + bc_ref[...])                                            # (B, E)
    x = jnp.maximum(x, 0.0)

    # --- single GRU step (PyTorch gate order: r, z, n), fused gate matmuls ---
    gi = jnp.dot(x, w_ih_ref[...], preferred_element_type=f32) + b_ih_ref[...]   # (B, 3H)
    gh = jnp.dot(h0, w_hh_ref[...], preferred_element_type=f32) + b_hh_ref[...]  # (B, 3H)
    r = jax.nn.sigmoid(gi[:, :H] + gh[:, :H])
    z = jax.nn.sigmoid(gi[:, H:2 * H] + gh[:, H:2 * H])
    n = jnp.tanh(gi[:, 2 * H:] + r * gh[:, 2 * H:])
    hn = (1.0 - z) * n + z * h0                                    # (B, H)
    hnew_ref[...] = hn

    # --- output head + log_softmax -------------------------------------------
    ologits = jnp.dot(hn, wo_ref[...], preferred_element_type=f32) + bo_ref[...]
    m2 = jnp.max(ologits, axis=1, keepdims=True)
    s = ologits - m2
    logp_ref[...] = s - jnp.log(jnp.sum(jnp.exp(s), axis=1, keepdims=True))


# ----------------------------------------------------------------------------
# One-time parameter preparation (hoisted out of the per-step path)
# ----------------------------------------------------------------------------
def prepare_params(params, cfg):
    """Transpose / split PyTorch-layout (out, in) weights into kernel layout once."""
    E = cfg["embeddingSize"]
    f32 = jnp.float32
    w_attn, b_attn = params["w_attn"], params["b_attn"]
    w_comb, b_comb = params["w_comb"], params["b_comb"]
    w_ih, b_ih = params["w_ih"], params["b_ih"]
    w_hh, b_hh = params["w_hh"], params["b_hh"]
    w_out, b_out = params["w_out"], params["b_out"]

    return {
        "embedding": params["embedding"].astype(f32),
        "wa_e": w_attn[:, :E].T.astype(f32),       # (E, L)
        "wa_h": w_attn[:, E:].T.astype(f32),       # (H, L)
        "ba": b_attn[None, :].astype(f32),         # (1, L)
        "wc_e": w_comb[:, :E].T.astype(f32),       # (E, E)
        "wc_c": w_comb[:, E:].T.astype(f32),       # (H, E)
        "bc": b_comb[None, :].astype(f32),         # (1, E)
        "w_ih": w_ih.T.astype(f32),                # (E, 3H), gates r|z|n along lanes
        "w_hh": w_hh.T.astype(f32),                # (H, 3H)
        "b_ih": b_ih[None, :].astype(f32),         # (1, 3H)
        "b_hh": b_hh[None, :].astype(f32),         # (1, 3H)
        "wo": w_out.T.astype(f32),                 # (H, O)
        "bo": b_out[None, :].astype(f32),          # (1, O)
    }


# ----------------------------------------------------------------------------
# Per-step wrapper: embedding gather (glue) + single pallas_call
# ----------------------------------------------------------------------------
def decoder_attention_forward(input_ids, hidden, encoder_outputs, prepped, cfg):
    B = cfg["batchSize"]
    H = cfg["hiddenSize"]
    L = cfg["maxLengthWord"] + 1
    O = cfg["outputSize"]
    f32 = jnp.float32

    # Embedding lookup (glue). Dropout is identity in eval mode.
    emb = jnp.take(prepped["embedding"], input_ids.reshape(-1), axis=0)   # (B, E)
    h0 = hidden[0].astype(f32)                                            # (B, H)

    args = (
        emb, h0, encoder_outputs.astype(f32),
        prepped["wa_e"], prepped["wa_h"], prepped["ba"],
        prepped["wc_e"], prepped["wc_c"], prepped["bc"],
        prepped["w_ih"], prepped["w_hh"], prepped["b_ih"], prepped["b_hh"],
        prepped["wo"], prepped["bo"],
    )

    vmem = pl.BlockSpec(memory_space=pltpu.MemorySpace.VMEM)
    log_probs, h_new, attn_w = pl.pallas_call(
        _decoder_attention_kernel,
        out_shape=(
            jax.ShapeDtypeStruct((B, O), f32),
            jax.ShapeDtypeStruct((B, H), f32),
            jax.ShapeDtypeStruct((B, L), f32),
        ),
        in_specs=[vmem] * len(args),
        out_specs=(vmem, vmem, vmem),
    )(*args)

    return log_probs, h_new[None], attn_w


# ----------------------------------------------------------------------------
# Deterministic parameter init (shapes follow the PyTorch module __init__)
# ----------------------------------------------------------------------------
def init_params(key, cfg):
    E = cfg["embeddingSize"]
    H = cfg["hiddenSize"]
    L = cfg["maxLengthWord"] + 1
    O = cfg["outputSize"]

    keys = jax.random.split(key, 11)

    def lin(k, out_f, in_f):
        k1, k2 = jax.random.split(k)
        w = jax.random.normal(k1, (out_f, in_f), jnp.float32) * 0.1
        b = jax.random.normal(k2, (out_f,), jnp.float32) * 0.1
        return w, b

    w_attn, b_attn = lin(keys[1], L, E + H)        # attentionLayer
    w_comb, b_comb = lin(keys[2], E, E + H)        # attentionCombine
    w_ih, b_ih = lin(keys[3], 3 * H, E)            # GRU weight_ih_l0 (r|z|n)
    w_hh, b_hh = lin(keys[4], 3 * H, H)            # GRU weight_hh_l0 (r|z|n)
    w_out, b_out = lin(keys[5], O, H)              # out (non-bidirectional)

    return {
        "embedding": jax.random.normal(keys[0], (O, E), jnp.float32) * 0.1,
        "w_attn": w_attn, "b_attn": b_attn,
        "w_comb": w_comb, "b_comb": b_comb,
        "w_ih": w_ih, "b_ih": b_ih,
        "w_hh": w_hh, "b_hh": b_hh,
        "w_out": w_out, "b_out": b_out,
    }


# ----------------------------------------------------------------------------
# Pure-JAX reference (mirrors the PyTorch forward) for verification
# ----------------------------------------------------------------------------
def reference_forward(input_ids, hidden, encoder_outputs, params, cfg):
    H = cfg["hiddenSize"]
    emb = jnp.take(params["embedding"], input_ids.reshape(-1), axis=0)
    h0 = hidden[0]
    cat1 = jnp.concatenate([emb, h0], axis=1)
    logits = cat1 @ params["w_attn"].T + params["b_attn"]
    attn_w = jax.nn.softmax(logits, axis=1)
    ctx = jnp.einsum("bl,blh->bh", attn_w, encoder_outputs)
    cat2 = jnp.concatenate([emb, ctx], axis=1)
    x = jax.nn.relu(cat2 @ params["w_comb"].T + params["b_comb"])
    gi = x @ params["w_ih"].T + params["b_ih"]
    gh = h0 @ params["w_hh"].T + params["b_hh"]
    r = jax.nn.sigmoid(gi[:, :H] + gh[:, :H])
    z = jax.nn.sigmoid(gi[:, H:2 * H] + gh[:, H:2 * H])
    n = jnp.tanh(gi[:, 2 * H:] + r * gh[:, 2 * H:])
    hn = (1.0 - z) * n + z * h0
    logp = jax.nn.log_softmax(hn @ params["w_out"].T + params["b_out"], axis=1)
    return logp, hn[None], attn_w


if __name__ == "__main__":
    cfg = dict(
        hiddenSize=32, embeddingSize=32, cellType="GRU",
        numLayers=1, dropout=0.0, maxLengthWord=7,
        batchSize=2, bidirectional=False, outputSize=16,
    )
    B, E, H = cfg["batchSize"], cfg["embeddingSize"], cfg["hiddenSize"]
    L, O = cfg["maxLengthWord"] + 1, cfg["outputSize"]

    key = jax.random.PRNGKey(0)
    kp, k1, k2, k3 = jax.random.split(key, 4)

    params = init_params(kp, cfg)
    prepped = prepare_params(params, cfg)          # one-time weight prep (hoisted)

    input_ids = jax.random.randint(k1, (1, B), 0, O, dtype=jnp.int32)
    hidden = jax.random.normal(k2, (1, B, H), jnp.float32) * 0.1
    encoder_outputs = jax.random.normal(k3, (B, L, H), jnp.float32) * 0.1

    @jax.jit
    def fwd(ids, h, enc, p):
        return decoder_attention_forward(ids, h, enc, p, cfg)

    log_probs, h_new, attn_w = jax.block_until_ready(
        fwd(input_ids, hidden, encoder_outputs, prepped))

    ref_lp, ref_h, ref_aw = reference_forward(
        input_ids, hidden, encoder_outputs, params, cfg)

    assert log_probs.shape == (B, O) and h_new.shape == (1, B, H) and attn_w.shape == (B, L)
    assert jnp.all(jnp.isfinite(log_probs))
    assert jnp.allclose(log_probs, ref_lp, atol=5e-3, rtol=5e-3)
    assert jnp.allclose(h_new, ref_h, atol=5e-3, rtol=5e-3)
    assert jnp.allclose(attn_w, ref_aw, atol=5e-3, rtol=5e-3)

    print("KERNEL_OK")
</pallas_src>

<mosaic_0001>
module attributes {stable_mosaic.version = 11 : i64} {
  func.func @_decoder_attention_kernel(%arg0: memref<2x32xf32, #tpu.memory_space<vmem>>, %arg1: memref<2x32xf32, #tpu.memory_space<vmem>>, %arg2: memref<2x8x32xf32, #tpu.memory_space<vmem>>, %arg3: memref<32x8xf32, #tpu.memory_space<vmem>>, %arg4: memref<32x8xf32, #tpu.memory_space<vmem>>, %arg5: memref<1x8xf32, #tpu.memory_space<vmem>>, %arg6: memref<32x32xf32, #tpu.memory_space<vmem>>, %arg7: memref<32x32xf32, #tpu.memory_space<vmem>>, %arg8: memref<1x32xf32, #tpu.memory_space<vmem>>, %arg9: memref<32x96xf32, #tpu.memory_space<vmem>>, %arg10: memref<32x96xf32, #tpu.memory_space<vmem>>, %arg11: memref<1x96xf32, #tpu.memory_space<vmem>>, %arg12: memref<1x96xf32, #tpu.memory_space<vmem>>, %arg13: memref<32x16xf32, #tpu.memory_space<vmem>>, %arg14: memref<1x16xf32, #tpu.memory_space<vmem>>, %arg15: memref<2x16xf32, #tpu.memory_space<vmem>>, %arg16: memref<2x32xf32, #tpu.memory_space<vmem>>, %arg17: memref<2x8xf32, #tpu.memory_space<vmem>>) attributes {dimension_semantics = [], scalar_prefetch = 0 : i64, scratch_operands = 0 : i64, tpu.core_type = #tpu.core_type<tc>} {
    %c0 = arith.constant 0 : index
    %c0_0 = arith.constant 0 : index
    %0 = vector.load %arg0[%c0, %c0_0] : memref<2x32xf32, #tpu.memory_space<vmem>>, vector<2x32xf32>
    %c0_1 = arith.constant 0 : index
    %c0_2 = arith.constant 0 : index
    %1 = vector.load %arg1[%c0_1, %c0_2] : memref<2x32xf32, #tpu.memory_space<vmem>>, vector<2x32xf32>
    %c0_3 = arith.constant 0 : index
    %c0_4 = arith.constant 0 : index
    %2 = vector.load %arg3[%c0_3, %c0_4] : memref<32x8xf32, #tpu.memory_space<vmem>>, vector<32x8xf32>
    %cst = arith.constant dense<0.000000e+00> : vector<2x8xf32>
    %3 = tpu.matmul %0, %2, %cst {dimension_numbers = #tpu.dot_dimension_numbers<[1], [0], [0], [1], [0, 0, 1, 1], [], []>} : vector<2x32xf32>, vector<32x8xf32>, vector<2x8xf32> -> vector<2x8xf32>
    %c0_5 = arith.constant 0 : index
    %c0_6 = arith.constant 0 : index
    %4 = vector.load %arg4[%c0_5, %c0_6] : memref<32x8xf32, #tpu.memory_space<vmem>>, vector<32x8xf32>
    %cst_7 = arith.constant dense<0.000000e+00> : vector<2x8xf32>
    %5 = tpu.matmul %1, %4, %cst_7 {dimension_numbers = #tpu.dot_dimension_numbers<[1], [0], [0], [1], [0, 0, 1, 1], [], []>} : vector<2x32xf32>, vector<32x8xf32>, vector<2x8xf32> -> vector<2x8xf32>
    %6 = arith.addf %3, %5 : vector<2x8xf32>
    %c0_8 = arith.constant 0 : index
    %c0_9 = arith.constant 0 : index
    %7 = vector.load %arg5[%c0_8, %c0_9] : memref<1x8xf32, #tpu.memory_space<vmem>>, vector<1x8xf32>
    %8 = vector.broadcast %7 : vector<1x8xf32> to vector<2x8xf32>
    %9 = arith.addf %6, %8 : vector<2x8xf32>
    %cst_10 = arith.constant dense<0xFF800000> : vector<2xf32>
    %10 = vector.multi_reduction <maximumf>, %9, %cst_10 [1] : vector<2x8xf32> to vector<2xf32>
    %11 = vector.shape_cast %10 : vector<2xf32> to vector<2x1xf32>
    %12 = vector.broadcast %11 : vector<2x1xf32> to vector<2x8xf32>
    %13 = arith.subf %9, %12 : vector<2x8xf32>
    %14 = math.exp %13 : vector<2x8xf32>
    %cst_11 = arith.constant dense<0.000000e+00> : vector<2xf32>
    %15 = vector.multi_reduction <add>, %14, %cst_11 [1] : vector<2x8xf32> to vector<2xf32>
    %16 = vector.shape_cast %15 : vector<2xf32> to vector<2x1xf32>
    %17 = tpu.reciprocal %16 {approx = true} : vector<2x1xf32> -> vector<2x1xf32>
    %18 = vector.broadcast %17 : vector<2x1xf32> to vector<2x8xf32>
    %19 = arith.mulf %14, %18 : vector<2x8xf32>
    %c0_12 = arith.constant 0 : index
    %c0_13 = arith.constant 0 : index
    %20 = vector.load %arg17[%c0_12, %c0_13] : memref<2x8xf32, #tpu.memory_space<vmem>>, vector<2x8xf32>
    tpu.vector_store %arg17[%c0_12, %c0_13], %19 {strides = array<i32>} : memref<2x8xf32, #tpu.memory_space<vmem>>, vector<2x8xf32>,
    %21 = vector.shape_cast %19 : vector<2x8xf32> to vector<2x1x8xf32>
    %c0_14 = arith.constant 0 : index
    %c0_15 = arith.constant 0 : index
    %c0_16 = arith.constant 0 : index
    %22 = vector.load %arg2[%c0_14, %c0_15, %c0_16] : memref<2x8x32xf32, #tpu.memory_space<vmem>>, vector<2x8x32xf32>
    "tpu.trace_start"() <{level = 10 : i32, message = "bql,blh->bqh"}> : () -> ()
    %cst_17 = arith.constant dense<0.000000e+00> : vector<2x1x32xf32>
    %23 = tpu.matmul %21, %22, %cst_17 {dimension_numbers = #tpu.dot_dimension_numbers<[2], [1], [1], [2], [0, 0, 0, 1, 1, 2], [0], [0]>} : vector<2x1x8xf32>, vector<2x8x32xf32>, vector<2x1x32xf32> -> vector<2x1x32xf32>
    "tpu.trace_stop"() : () -> ()
    %24 = vector.shape_cast %23 : vector<2x1x32xf32> to vector<2x32xf32>
    %c0_18 = arith.constant 0 : index
    %c0_19 = arith.constant 0 : index
    %25 = vector.load %arg6[%c0_18, %c0_19] : memref<32x32xf32, #tpu.memory_space<vmem>>, vector<32x32xf32>
    %cst_20 = arith.constant dense<0.000000e+00> : vector<2x32xf32>
    %26 = tpu.matmul %0, %25, %cst_20 {dimension_numbers = #tpu.dot_dimension_numbers<[1], [0], [0], [1], [0, 0, 1, 1], [], []>} : vector<2x32xf32>, vector<32x32xf32>, vector<2x32xf32> -> vector<2x32xf32>
    %c0_21 = arith.constant 0 : index
    %c0_22 = arith.constant 0 : index
    %27 = vector.load %arg7[%c0_21, %c0_22] : memref<32x32xf32, #tpu.memory_space<vmem>>, vector<32x32xf32>
    %cst_23 = arith.constant dense<0.000000e+00> : vector<2x32xf32>
    %28 = tpu.matmul %24, %27, %cst_23 {dimension_numbers = #tpu.dot_dimension_numbers<[1], [0], [0], [1], [0, 0, 1, 1], [], []>} : vector<2x32xf32>, vector<32x32xf32>, vector<2x32xf32> -> vector<2x32xf32>
    %29 = arith.addf %26, %28 : vector<2x32xf32>
    %c0_24 = arith.constant 0 : index
    %c0_25 = arith.constant 0 : index
    %30 = vector.load %arg8[%c0_24, %c0_25] : memref<1x32xf32, #tpu.memory_space<vmem>>, vector<1x32xf32>
    %31 = vector.broadcast %30 : vector<1x32xf32> to vector<2x32xf32>
    %32 = arith.addf %29, %31 : vector<2x32xf32>
    %cst_26 = arith.constant 0.000000e+00 : f32
    %33 = vector.broadcast %cst_26 : f32 to vector<2x32xf32>
    %34 = arith.maximumf %32, %33 : vector<2x32xf32>
    %c0_27 = arith.constant 0 : index
    %c0_28 = arith.constant 0 : index
    %35 = vector.load %arg9[%c0_27, %c0_28] : memref<32x96xf32, #tpu.memory_space<vmem>>, vector<32x96xf32>
    %cst_29 = arith.constant dense<0.000000e+00> : vector<2x96xf32>
    %36 = tpu.matmul %34, %35, %cst_29 {dimension_numbers = #tpu.dot_dimension_numbers<[1], [0], [0], [1], [0, 0, 1, 1], [], []>} : vector<2x32xf32>, vector<32x96xf32>, vector<2x96xf32> -> vector<2x96xf32>
    %c0_30 = arith.constant 0 : index
    %c0_31 = arith.constant 0 : index
    %37 = vector.load %arg11[%c0_30, %c0_31] : memref<1x96xf32, #tpu.memory_space<vmem>>, vector<1x96xf32>
    %38 = vector.broadcast %37 : vector<1x96xf32> to vector<2x96xf32>
    %39 = arith.addf %36, %38 : vector<2x96xf32>
    %c0_32 = arith.constant 0 : index
    %c0_33 = arith.constant 0 : index
    %40 = vector.load %arg10[%c0_32, %c0_33] : memref<32x96xf32, #tpu.memory_space<vmem>>, vector<32x96xf32>
    %cst_34 = arith.constant dense<0.000000e+00> : vector<2x96xf32>
    %41 = tpu.matmul %1, %40, %cst_34 {dimension_numbers = #tpu.dot_dimension_numbers<[1], [0], [0], [1], [0, 0, 1, 1], [], []>} : vector<2x32xf32>, vector<32x96xf32>, vector<2x96xf32> -> vector<2x96xf32>
    %c0_35 = arith.constant 0 : index
    %c0_36 = arith.constant 0 : index
    %42 = vector.load %arg12[%c0_35, %c0_36] : memref<1x96xf32, #tpu.memory_space<vmem>>, vector<1x96xf32>
    %43 = vector.broadcast %42 : vector<1x96xf32> to vector<2x96xf32>
    %44 = arith.addf %41, %43 : vector<2x96xf32>
    %45 = vector.extract_strided_slice %39 {offsets = [0, 0], sizes = [2, 32], strides = [1, 1]} : vector<2x96xf32> to vector<2x32xf32>
    %46 = vector.extract_strided_slice %44 {offsets = [0, 0], sizes = [2, 32], strides = [1, 1]} : vector<2x96xf32> to vector<2x32xf32>
    %47 = arith.addf %45, %46 : vector<2x32xf32>
    %48 = arith.negf %47 : vector<2x32xf32>
    %49 = math.exp %48 : vector<2x32xf32>
    %cst_37 = arith.constant 1.000000e+00 : f32
    %50 = vector.broadcast %cst_37 : f32 to vector<2x32xf32>
    %51 = arith.addf %50, %49 : vector<2x32xf32>
    %52 = arith.divf %50, %51 : vector<2x32xf32>
    %53 = vector.extract_strided_slice %39 {offsets = [0, 32], sizes = [2, 32], strides = [1, 1]} : vector<2x96xf32> to vector<2x32xf32>
    %54 = vector.extract_strided_slice %44 {offsets = [0, 32], sizes = [2, 32], strides = [1, 1]} : vector<2x96xf32> to vector<2x32xf32>
    %55 = arith.addf %53, %54 : vector<2x32xf32>
    %56 = arith.negf %55 : vector<2x32xf32>
    %57 = math.exp %56 : vector<2x32xf32>
    %cst_38 = arith.constant 1.000000e+00 : f32
    %58 = vector.broadcast %cst_38 : f32 to vector<2x32xf32>
    %59 = arith.addf %58, %57 : vector<2x32xf32>
    %60 = arith.divf %58, %59 : vector<2x32xf32>
    %61 = vector.extract_strided_slice %39 {offsets = [0, 64], sizes = [2, 32], strides = [1, 1]} : vector<2x96xf32> to vector<2x32xf32>
    %62 = vector.extract_strided_slice %44 {offsets = [0, 64], sizes = [2, 32], strides = [1, 1]} : vector<2x96xf32> to vector<2x32xf32>
    %63 = arith.mulf %52, %62 : vector<2x32xf32>
    %64 = arith.addf %61, %63 : vector<2x32xf32>
    %65 = math.tanh %64 : vector<2x32xf32>
    %cst_39 = arith.constant 1.000000e+00 : f32
    %66 = vector.broadcast %cst_39 : f32 to vector<2x32xf32>
    %67 = arith.subf %66, %60 : vector<2x32xf32>
    %68 = arith.mulf %67, %65 : vector<2x32xf32>
    %69 = arith.mulf %60, %1 : vector<2x32xf32>
    %70 = arith.addf %68, %69 : vector<2x32xf32>
    %c0_40 = arith.constant 0 : index
    %c0_41 = arith.constant 0 : index
    %71 = vector.load %arg16[%c0_40, %c0_41] : memref<2x32xf32, #tpu.memory_space<vmem>>, vector<2x32xf32>
    tpu.vector_store %arg16[%c0_40, %c0_41], %70 {strides = array<i32>} : memref<2x32xf32, #tpu.memory_space<vmem>>, vector<2x32xf32>,
    %c0_42 = arith.constant 0 : index
    %c0_43 = arith.constant 0 : index
    %72 = vector.load %arg13[%c0_42, %c0_43] : memref<32x16xf32, #tpu.memory_space<vmem>>, vector<32x16xf32>
    %cst_44 = arith.constant dense<0.000000e+00> : vector<2x16xf32>
    %73 = tpu.matmul %70, %72, %cst_44 {dimension_numbers = #tpu.dot_dimension_numbers<[1], [0], [0], [1], [0, 0, 1, 1], [], []>} : vector<2x32xf32>, vector<32x16xf32>, vector<2x16xf32> -> vector<2x16xf32>
    %c0_45 = arith.constant 0 : index
    %c0_46 = arith.constant 0 : index
    %74 = vector.load %arg14[%c0_45, %c0_46] : memref<1x16xf32, #tpu.memory_space<vmem>>, vector<1x16xf32>
    %75 = vector.broadcast %74 : vector<1x16xf32> to vector<2x16xf32>
    %76 = arith.addf %73, %75 : vector<2x16xf32>
    %cst_47 = arith.constant dense<0xFF800000> : vector<2xf32>
    %77 = vector.multi_reduction <maximumf>, %76, %cst_47 [1] : vector<2x16xf32> to vector<2xf32>
    %78 = vector.shape_cast %77 : vector<2xf32> to vector<2x1xf32>
    %79 = vector.broadcast %78 : vector<2x1xf32> to vector<2x16xf32>
    %80 = arith.subf %76, %79 : vector<2x16xf32>
    %81 = math.exp %80 : vector<2x16xf32>
    %cst_48 = arith.constant dense<0.000000e+00> : vector<2xf32>
    %82 = vector.multi_reduction <add>, %81, %cst_48 [1] : vector<2x16xf32> to vector<2xf32>
    %83 = vector.shape_cast %82 : vector<2xf32> to vector<2x1xf32>
    %84 = math.log %83 : vector<2x1xf32>
    %85 = vector.broadcast %84 : vector<2x1xf32> to vector<2x16xf32>
    %86 = arith.subf %80, %85 : vector<2x16xf32>
    %c0_49 = arith.constant 0 : index
    %c0_50 = arith.constant 0 : index
    %87 = vector.load %arg15[%c0_49, %c0_50] : memref<2x16xf32, #tpu.memory_space<vmem>>, vector<2x16xf32>
    tpu.vector_store %arg15[%c0_49, %c0_50], %86 {strides = array<i32>} : memref<2x16xf32, #tpu.memory_space<vmem>>, vector<2x16xf32>,
    return
  }
}

</mosaic_0001>

<llo_original>
// kernel: fwd.1
$region0: #{fwd.1}
  #allocation0 [shape = 'u32[]', space=smem, size = 0x4, offset = 0x4, fixed_abs, tag = 'smem constant byte address 0x4 - core index']
  #allocation1 [shape = 'u32[144,128]{1,0:T(1,128)}', space=vmem, size = 0x12000, scoped, tag = 'internal scratch']
  %s0 = inlined_call_operand.vmem [shape: f32[2,32], index: 0, kind: input, shape index: {}]
  %s1 = inlined_call_operand.hbm [shape: f32[2,32], index: 1, kind: input, shape index: {}]
  %s2 = inlined_call_operand.vmem [shape: f32[2,8,32], index: 2, kind: input, shape index: {}]
  %s3 = inlined_call_operand.vmem [shape: f32[32,8], index: 3, kind: input, shape index: {}]
  %s4 = inlined_call_operand.vmem [shape: f32[32,8], index: 4, kind: input, shape index: {}]
  %s5 = inlined_call_operand.vmem [shape: f32[1,8], index: 5, kind: input, shape index: {}]
  %s6 = inlined_call_operand.vmem [shape: f32[32,32], index: 6, kind: input, shape index: {}]
  %s7 = inlined_call_operand.vmem [shape: f32[32,32], index: 7, kind: input, shape index: {}]
  %s8 = inlined_call_operand.vmem [shape: f32[1,32], index: 8, kind: input, shape index: {}]
  %s9 = inlined_call_operand.vmem [shape: f32[32,96], index: 9, kind: input, shape index: {}]
  %s10 = inlined_call_operand.vmem [shape: f32[32,96], index: 10, kind: input, shape index: {}]
  %s11 = inlined_call_operand.vmem [shape: f32[1,96], index: 11, kind: input, shape index: {}]
  %s12 = inlined_call_operand.hbm [shape: f32[1,96], index: 12, kind: input, shape index: {}]
  %s13 = inlined_call_operand.vmem [shape: f32[32,16], index: 13, kind: input, shape index: {}]
  %s14 = inlined_call_operand.vmem [shape: f32[1,16], index: 14, kind: input, shape index: {}]
  %s15 = inlined_call_operand.hbm [shape: f32[2,16], index: 15, kind: output, shape index: {0}]
  %s16 = inlined_call_operand.hbm [shape: f32[2,32], index: 16, kind: output, shape index: {1}]
  %s17 = inlined_call_operand.hbm [shape: f32[2,8], index: 17, kind: output, shape index: {2}]
  %18 = xla_tuple %s15, %s16, %s17
  %s19 = sld [smem:[#allocation0]]
  $region94: #{fwd.1} parent=0
    _
  %s21 = ssub.s32 1, %s19
  %s22 = scalar_select 0, %s21, %s19
  $region1: #{fwd.1} parent=0
    #allocation2 [shape = 'u8[1024]{0}', space=vmem, size = 0x400, scoped, tag = 'input window, operand 1, single buffered']
    #allocation3 [shape = 's32[1]{0}', space=sflag, size = 0x4, scoped, tag = 'scoped memory for fwd.1']
    #allocation4 [shape = 's32[1]{0}', space=sflag, size = 0x4, scoped, tag = 'scoped memory for fwd.1']
    #allocation5 [shape = 'u8[512]{0}', space=vmem, size = 0x400, scoped, tag = 'input window, operand 12, single buffered']
    #allocation6 [shape = 's32[1]{0}', space=sflag, size = 0x4, scoped, tag = 'scoped memory for fwd.1']
    #allocation7 [shape = 'u8[1024]{0}', space=vmem, size = 0x400, scoped, tag = 'output window, operand 0, single buffered']
    #allocation8 [shape = 'u8[1024]{0}', space=vmem, size = 0x400, scoped, tag = 'output window, operand 1, single buffered']
    #allocation9 [shape = 's32[1]{0}', space=sflag, size = 0x4, scoped, tag = 'scoped memory for fwd.1']
    #allocation10 [shape = 'u8[1024]{0}', space=vmem, size = 0x400, scoped, tag = 'output window, operand 2, single buffered']
    %23 = vsyncpa [#allocation3], 0
    %24 = vsyncpa [#allocation6], 0
    %25 = vsyncpa [#allocation4], 0
    %26 = vsyncpa [#allocation9], 0
    // Predicated region
    $region2: #{fwd.1} parent=1 // pred_check
      _
    $region3: #{fwd.1} parent=1 // pred_check_branch
      %28 = sbr.rel (0) target = $region5
    $region4: #{fwd.1} parent=1 // pred_region
      _
    $region5: #{fwd.1} parent=1 // pred_fallthru
      _
    // Predicated region
    $region6: #{fwd.1} parent=1 // pred_check
      _
    $region7: #{fwd.1} parent=1 // pred_check_branch
      %30 = sbr.rel (0) target = $region9
    $region8: #{fwd.1} parent=1 // pred_region
      %s32 = ssub.s32 32, 32
      %33 = vsyncadd [#allocation3], %s32
      %s35 = sshll.u32 [#allocation2], 4
      %s36 = int_to_ptr.vmem [resolvable:$true] %s35
      %38 = dma.hbm_to_vmem [thread:$0]  %s1, 32, %s36, [#allocation3]
    $region9: #{fwd.1} parent=1 // pred_fallthru
      _
    // Predicated region
    $region10: #{fwd.1} parent=1 // pred_check
      _
    $region11: #{fwd.1} parent=1 // pred_check_branch
      %40 = sbr.rel (0) target = $region13
    $region12: #{fwd.1} parent=1 // pred_region
      _
    $region13: #{fwd.1} parent=1 // pred_fallthru
      _
    // Predicated region
    $region14: #{fwd.1} parent=1 // pred_check
      _
    $region15: #{fwd.1} parent=1 // pred_check_branch
      %42 = sbr.rel (0) target = $region17
    $region16: #{fwd.1} parent=1 // pred_region
      _
    $region17: #{fwd.1} parent=1 // pred_fallthru
      _
    // Predicated region
    $region18: #{fwd.1} parent=1 // pred_check
      _
    $region19: #{fwd.1} parent=1 // pred_check_branch
      %44 = sbr.rel (0) target = $region21
    $region20: #{fwd.1} parent=1 // pred_region
      _
    $region21: #{fwd.1} parent=1 // pred_fallthru
      _
    // Predicated region
    $region22: #{fwd.1} parent=1 // pred_check
      _
    $region23: #{fwd.1} parent=1 // pred_check_branch
      %46 = sbr.rel (0) target = $region25
    $region24: #{fwd.1} parent=1 // pred_region
      _
    $region25: #{fwd.1} parent=1 // pred_fallthru
      _
    // Predicated region
    $region26: #{fwd.1} parent=1 // pred_check
      _
    $region27: #{fwd.1} parent=1 // pred_check_branch
      %48 = sbr.rel (0) target = $region29
    $region28: #{fwd.1} parent=1 // pred_region
      _
    $region29: #{fwd.1} parent=1 // pred_fallthru
      _
    // Predicated region
    $region30: #{fwd.1} parent=1 // pred_check
      _
    $region31: #{fwd.1} parent=1 // pred_check_branch
      %50 = sbr.rel (0) target = $region33
    $region32: #{fwd.1} parent=1 // pred_region
      _
    $region33: #{fwd.1} parent=1 // pred_fallthru
      _
    // Predicated region
    $region34: #{fwd.1} parent=1 // pred_check
      _
    $region35: #{fwd.1} parent=1 // pred_check_branch
      %52 = sbr.rel (0) target = $region37
    $region36: #{fwd.1} parent=1 // pred_region
      _
    $region37: #{fwd.1} parent=1 // pred_fallthru
      _
    // Predicated region
    $region38: #{fwd.1} parent=1 // pred_check
      _
    $region39: #{fwd.1} parent=1 // pred_check_branch
      %54 = sbr.rel (0) target = $region41
    $region40: #{fwd.1} parent=1 // pred_region
      _
    $region41: #{fwd.1} parent=1 // pred_fallthru
      _
    // Predicated region
    $region42: #{fwd.1} parent=1 // pred_check
      _
    $region43: #{fwd.1} parent=1 // pred_check_branch
      %56 = sbr.rel (0) target = $region45
    $region44: #{fwd.1} parent=1 // pred_region
      _
    $region45: #{fwd.1} parent=1 // pred_fallthru
      _
    // Predicated region
    $region46: #{fwd.1} parent=1 // pred_check
      _
    $region47: #{fwd.1} parent=1 // pred_check_branch
      %58 = sbr.rel (0) target = $region49
    $region48: #{fwd.1} parent=1 // pred_region
      _
    $region49: #{fwd.1} parent=1 // pred_fallthru
      _
    // Predicated region
    $region50: #{fwd.1} parent=1 // pred_check
      _
    $region51: #{fwd.1} parent=1 // pred_check_branch
      %60 = sbr.rel (0) target = $region53
    $region52: #{fwd.1} parent=1 // pred_region
      %s62 = ssub.s32 16, 16
      %63 = vsyncadd [#allocation6], %s62
      %s65 = sshll.u32 [#allocation5], 4
      %s66 = int_to_ptr.vmem [resolvable:$true] %s65
      %68 = dma.hbm_to_vmem [thread:$0]  %s12, 16, %s66, [#allocation6]
    $region53: #{fwd.1} parent=1 // pred_fallthru
      _
    // Predicated region
    $region54: #{fwd.1} parent=1 // pred_check
      _
    $region55: #{fwd.1} parent=1 // pred_check_branch
      %70 = sbr.rel (0) target = $region57
    $region56: #{fwd.1} parent=1 // pred_region
      _
    $region57: #{fwd.1} parent=1 // pred_fallthru
      _
    // Predicated region
    $region58: #{fwd.1} parent=1 // pred_check
      _
    $region59: #{fwd.1} parent=1 // pred_check_branch
      %72 = sbr.rel (0) target = $region61
    $region60: #{fwd.1} parent=1 // pred_region
      _
    $region61: #{fwd.1} parent=1 // pred_fallthru
      _
    // Predicated region
    $region62: #{fwd.1} parent=1 // pred_check
      _
    $region63: #{fwd.1} parent=1 // pred_check_branch
      %74 = sbr.rel (0) target = $region65
    $region64: #{fwd.1} parent=1 // pred_region
      %75 = dma.done [#allocation3], 32
    $region65: #{fwd.1} parent=1 // pred_fallthru
      _
    // Predicated region
    $region66: #{fwd.1} parent=1 // pred_check
      _
    $region67: #{fwd.1} parent=1 // pred_check_branch
      %77 = sbr.rel (0) target = $region69
    $region68: #{fwd.1} parent=1 // pred_region
      %78 = dma.done [#allocation6], 16
    $region69: #{fwd.1} parent=1 // pred_fallthru
      _
    %v79 = vld [vmem:[%s0] sm:$0x3]
    %v80 = vld [vmem:[#allocation2] sm:$0x3]
    %v81 = vld [vmem:[%s3] sm:$0xff]
    %v82 = vld [vmem:[%s3 + $0x8] sm:$0xff]
    %v83 = vld [vmem:[%s3 + $0x10] sm:$0xff]
    %v84 = vld [vmem:[%s3 + $0x18] sm:$0xff]
    %v85 = vld [vmem:[%s4] sm:$0xff]
    %v86 = vld [vmem:[%s4 + $0x8] sm:$0xff]
    %v87 = vld [vmem:[%s4 + $0x10] sm:$0xff]
    %v88 = vld [vmem:[%s4 + $0x18] sm:$0xff]
    %vm89 = vcmask 261120
    %v91 = vsel %vm89, %v80, 0
    %93 = vmatprep.subr.mxu0 0.0
    %94 = vmatpush1.msra.mxu0 %v85
    %95 = vmatprep.subr.mxu0 0.0
    %96 = vmatpush1.msra.mxu0 %v86
    %97 = vmatprep.subr.mxu0 0.0
    %98 = vmatpush1.msra.mxu0 %v87
    %99 = vmatprep.subr.mxu0 0.0
    %100 = vmatpush1.msra.mxu0 %v88
    %101 = vmatprep.subr.mxu0 0.0
    %102 = vmatpush1.msra.mxu0 0.0
    %103 = vmatprep.subr.mxu0 0.0
    %104 = vmatpush1.msra.mxu0 0.0
    %105 = vmatprep.subr.mxu0 0.0
    %106 = vmatpush1.msra.mxu0 0.0
    %107 = vmatprep.subr.mxu0 0.0
    %108 = vmatpush1.msra.mxu0 0.0
    %109 = vmatprep.subr.mxu0 0.0
    %110 = vmatpush1.msra.mxu0 0.0
    %111 = vmatprep.subr.mxu0 0.0
    %112 = vmatpush1.msra.mxu0 0.0
    %113 = vmatprep.subr.mxu0 0.0
    %114 = vmatpush1.msra.mxu0 0.0
    %115 = vmatprep.subr.mxu0 0.0
    %116 = vmatpush1.msra.mxu0 0.0
    %117 = vmatprep.subr.mxu0 0.0
    %118 = vmatpush1.msra.mxu0 0.0
    %119 = vmatprep.subr.mxu0 0.0
    %120 = vmatpush1.msra.mxu0 0.0
    %121 = vmatprep.subr.mxu0 0.0
    %122 = vmatpush1.msra.mxu0 0.0
    %123 = vmatprep.subr.mxu0 0.0
    %124 = vmatpush1.msra.mxu0 0.0
    %125 = vmatprep.subr.mxu0 0.0
    %126 = vmatpush1.msra.mxu0 0.0
    %127 = vmatprep.subr.mxu0 0.0
    %128 = vmatpush1.msra.mxu0 0.0
    %129 = vmatprep.subr.mxu0 0.0
    %130 = vmatpush1.msra.mxu0 0.0
    %131 = vmatprep.subr.mxu0 0.0
    %132 = vmatpush1.msra.mxu0 0.0
    %133 = vmatprep.subr.mxu0 0.0
    %134 = vmatpush1.msra.mxu0 0.0
    %135 = vmatprep.subr.mxu0 0.0
    %136 = vmatpush1.msra.mxu0 0.0
    %137 = vmatprep.subr.mxu0 0.0
    %138 = vmatpush1.msra.mxu0 0.0
    %139 = vmatprep.subr.mxu0 0.0
    %140 = vmatpush1.msra.mxu0 0.0
    %141 = vmatprep.subr.mxu0 0.0
    %142 = vmatpush1.msra.mxu0 0.0
    %143 = vmatprep.subr.mxu0 0.0
    %144 = vmatpush1.msra.mxu0 0.0
    %145 = vmatprep.subr.mxu0 0.0
    %146 = vmatpush1.msra.mxu0 0.0
    %147 = vmatprep.subr.mxu0 0.0
    %148 = vmatpush1.msra.mxu0 0.0
    %149 = vmatprep.subr.mxu0 0.0
    %150 = vmatpush1.msra.mxu0 0.0
    %151 = vmatprep.subr.mxu0 0.0
    %152 = vmatpush1.msra.mxu0 0.0
    %153 = vmatprep.subr.mxu0 0.0
    %154 = vmatpush1.msra.mxu0 0.0
    %155 = vmatprep.subr.mxu0 0.0
    %156 = vmatpush1.msra.mxu0 0.0
    %157 = vmatprep.mubr.f32.mxu0 0.0
    %158 = vmatmul.mubr.f32.gmra.mrb[0].mxu0 %v91
    %v159 = vpop.f32.mrb[0].mxu0
    %v160 = vadd.f32 0.0, %v159
    %v161 = vpop.f32.mrb[0].mxu0
    %162 = vdwg.mxu0
    %v164 = vsel %vm89, %v79, 0
    %166 = vmatprep.subr.mxu0 0.0
    %167 = vmatpush1.msra.mxu0 %v81
    %168 = vmatprep.subr.mxu0 0.0
    %169 = vmatpush1.msra.mxu0 %v82
    %170 = vmatprep.subr.mxu0 0.0
    %171 = vmatpush1.msra.mxu0 %v83
    %172 = vmatprep.subr.mxu0 0.0
    %173 = vmatpush1.msra.mxu0 %v84
    %174 = vmatprep.subr.mxu0 0.0
    %175 = vmatpush1.msra.mxu0 0.0
    %176 = vmatprep.subr.mxu0 0.0
    %177 = vmatpush1.msra.mxu0 0.0
    %178 = vmatprep.subr.mxu0 0.0
    %179 = vmatpush1.msra.mxu0 0.0
    %180 = vmatprep.subr.mxu0 0.0
    %181 = vmatpush1.msra.mxu0 0.0
    %182 = vmatprep.subr.mxu0 0.0
    %183 = vmatpush1.msra.mxu0 0.0
    %184 = vmatprep.subr.mxu0 0.0
    %185 = vmatpush1.msra.mxu0 0.0
    %186 = vmatprep.subr.mxu0 0.0
    %187 = vmatpush1.msra.mxu0 0.0
    %188 = vmatprep.subr.mxu0 0.0
    %189 = vmatpush1.msra.mxu0 0.0
    %190 = vmatprep.subr.mxu0 0.0
    %191 = vmatpush1.msra.mxu0 0.0
    %192 = vmatprep.subr.mxu0 0.0
    %193 = vmatpush1.msra.mxu0 0.0
    %194 = vmatprep.subr.mxu0 0.0
    %195 = vmatpush1.msra.mxu0 0.0
    %196 = vmatprep.subr.mxu0 0.0
    %197 = vmatpush1.msra.mxu0 0.0
    %198 = vmatprep.subr.mxu0 0.0
    %199 = vmatpush1.msra.mxu0 0.0
    %200 = vmatprep.subr.mxu0 0.0
    %201 = vmatpush1.msra.mxu0 0.0
    %202 = vmatprep.subr.mxu0 0.0
    %203 = vmatpush1.msra.mxu0 0.0
    %204 = vmatprep.subr.mxu0 0.0
    %205 = vmatpush1.msra.mxu0 0.0
    %206 = vmatprep.subr.mxu0 0.0
    %207 = vmatpush1.msra.mxu0 0.0
    %208 = vmatprep.subr.mxu0 0.0
    %209 = vmatpush1.msra.mxu0 0.0
    %210 = vmatprep.subr.mxu0 0.0
    %211 = vmatpush1.msra.mxu0 0.0
    %212 = vmatprep.subr.mxu0 0.0
    %213 = vmatpush1.msra.mxu0 0.0
    %214 = vmatprep.subr.mxu0 0.0
    %215 = vmatpush1.msra.mxu0 0.0
    %216 = vmatprep.subr.mxu0 0.0
    %217 = vmatpush1.msra.mxu0 0.0
    %218 = vmatprep.subr.mxu0 0.0
    %219 = vmatpush1.msra.mxu0 0.0
    %220 = vmatprep.subr.mxu0 0.0
    %221 = vmatpush1.msra.mxu0 0.0
    %222 = vmatprep.subr.mxu0 0.0
    %223 = vmatpush1.msra.mxu0 0.0
    %224 = vmatprep.subr.mxu0 0.0
    %225 = vmatpush1.msra.mxu0 0.0
    %226 = vmatprep.subr.mxu0 0.0
    %227 = vmatpush1.msra.mxu0 0.0
    %228 = vmatprep.subr.mxu0 0.0
    %229 = vmatpush1.msra.mxu0 0.0
    %230 = vmatprep.mubr.f32.mxu0 0.0
    %231 = vmatmul.mubr.f32.gmra.mrb[0].mxu0 %v164
    %v232 = vpop.f32.mrb[0].mxu0
    %v233 = vadd.f32 %v160, %v232
    %v234 = vpop.f32.mrb[0].mxu0
    %235 = vdwg.mxu0
    %v236 = vld [vmem:[%s5] sm:$0x1]
    %v238 = vlaneseq
    %v239 = vshrl.u32 %v238, 7
    %v240 = vsub.s32 0, %v239
    %v241 = vrot.slane %v236, %v240
    %v243 = vadd.f32 %v233, %v241
    %vm244 = vcmask 58368
    %v245 = vsel %vm244, %v243, -inf
    %246 = vmax.xlane.f32.xlu0 %v245
    %v247 = vpop.xlane.xlu0 %246
    %v248 = vsub.f32 %v243, %v247
    %v249 = vmul.f32 %v248, 1.442695
    %v250 = vpow.pop %v249
    %v251 = vsel %vm244, %v250, 0.0
    %252 = vadd.xlane.f32.xlu0 %v251
    %v253 = vpop.xlane.xlu0 %252
    %v254 = vrcp.pop %v253
    %v255 = vmul.f32 %v250, %v254
    %256 = vst.msk [vmem:[#allocation10] sm:$0x3] %vm244, %v255
    %v259 = vunpack.c.l.s4 1966171168
    %v260 = vunpack.c.0.s8 %v259
    %v261 = vlaneseq
    %v262 = vshrl.u32 %v261, 7
    %v263 = vsub.s32 %v260, %v262
    %v264 = vrot.slane %v255, %v263
    %v265 = vcombine.high %v264, %v264
    %v267 = vunpack.c.l.s4 1966171168
    %v268 = vunpack.c.0.s8 %v267
    %v269 = vlaneseq
    %v270 = vshrl.u32 %v269, 7
    %v271 = vsub.s32 %v268, %v270
    %v272 = vrot.slane %v264, %v271
    %v274 = vunpack.c.l.s4 1966171168
    %v275 = vunpack.c.0.s8 %v274
    %v276 = vlaneseq
    %v277 = vshrl.u32 %v276, 7
    %v278 = vsub.s32 %v275, %v277
    %v279 = vrot.slane %v265, %v278
    %v280 = vld [vmem:[%s2] sm:$0xff]
    %v281 = vld [vmem:[%s2 + $0x8] sm:$0xff]
    %vm282 = vcmask 64512
    %v283 = vsel %vm282, %v272, 0
    %285 = vmatprep.subr.mxu0 0.0
    %286 = vmatpush1.msra.mxu0 %v280
    %287 = vmatprep.subr.mxu0 0.0
    %288 = vmatpush1.msra.mxu0 0.0
    %289 = vmatprep.subr.mxu0 0.0
    %290 = vmatpush1.msra.mxu0 0.0
    %291 = vmatprep.subr.mxu0 0.0
    %292 = vmatpush1.msra.mxu0 0.0
    %293 = vmatprep.subr.mxu0 0.0
    %294 = vmatpush1.msra.mxu0 0.0
    %295 = vmatprep.subr.mxu0 0.0
    %296 = vmatpush1.msra.mxu0 0.0
    %297 = vmatprep.subr.mxu0 0.0
    %298 = vmatpush1.msra.mxu0 0.0
    %299 = vmatprep.subr.mxu0 0.0
    %300 = vmatpush1.msra.mxu0 0.0
    %301 = vmatprep.subr.mxu0 0.0
    %302 = vmatpush1.msra.mxu0 0.0
    %303 = vmatprep.subr.mxu0 0.0
    %304 = vmatpush1.msra.mxu0 0.0
    %305 = vmatprep.subr.mxu0 0.0
    %306 = vmatpush1.msra.mxu0 0.0
    %307 = vmatprep.subr.mxu0 0.0
    %308 = vmatpush1.msra.mxu0 0.0
    %309 = vmatprep.subr.mxu0 0.0
    %310 = vmatpush1.msra.mxu0 0.0
    %311 = vmatprep.subr.mxu0 0.0
    %312 = vmatpush1.msra.mxu0 0.0
    %313 = vmatprep.subr.mxu0 0.0
    %314 = vmatpush1.msra.mxu0 0.0
    %315 = vmatprep.subr.mxu0 0.0
    %316 = vmatpush1.msra.mxu0 0.0
    %317 = vmatprep.subr.mxu0 0.0
    %318 = vmatpush1.msra.mxu0 0.0
    %319 = vmatprep.subr.mxu0 0.0
    %320 = vmatpush1.msra.mxu0 0.0
    %321 = vmatprep.subr.mxu0 0.0
    %322 = vmatpush1.msra.mxu0 0.0
    %323 = vmatprep.subr.mxu0 0.0
    %324 = vmatpush1.msra.mxu0 0.0
    %325 = vmatprep.subr.mxu0 0.0
    %326 = vmatpush1.msra.mxu0 0.0
    %327 = vmatprep.subr.mxu0 0.0
    %328 = vmatpush1.msra.mxu0 0.0
    %329 = vmatprep.subr.mxu0 0.0
    %330 = vmatpush1.msra.mxu0 0.0
    %331 = vmatprep.subr.mxu0 0.0
    %332 = vmatpush1.msra.mxu0 0.0
    %333 = vmatprep.subr.mxu0 0.0
    %334 = vmatpush1.msra.mxu0 0.0
    %335 = vmatprep.subr.mxu0 0.0
    %336 = vmatpush1.msra.mxu0 0.0
    %337 = vmatprep.subr.mxu0 0.0
    %338 = vmatpush1.msra.mxu0 0.0
    %339 = vmatprep.subr.mxu0 0.0
    %340 = vmatpush1.msra.mxu0 0.0
    %341 = vmatprep.subr.mxu0 0.0
    %342 = vmatpush1.msra.mxu0 0.0
    %343 = vmatprep.subr.mxu0 0.0
    %344 = vmatpush1.msra.mxu0 0.0
    %345 = vmatprep.subr.mxu0 0.0
    %346 = vmatpush1.msra.mxu0 0.0
    %347 = vmatprep.subr.mxu0 0.0
    %348 = vmatpush1.msra.mxu0 0.0
    %349 = vmatprep.mubr.f32.mxu0 0.0
    %350 = vmatmul.mubr.f32.gmra.mrb[0].mxu0 %v283
    %v351 = vpop.f32.mrb[0].mxu0
    %v352 = vadd.f32 0.0, %v351
    %v353 = vpop.f32.mrb[0].mxu0
    %354 = vdwg.mxu0
    %v355 = vsel %vm282, %v279, 0
    %357 = vmatprep.subr.mxu0 0.0
    %358 = vmatpush1.msra.mxu0 %v281
    %359 = vmatprep.subr.mxu0 0.0
    %360 = vmatpush1.msra.mxu0 0.0
    %361 = vmatprep.subr.mxu0 0.0
    %362 = vmatpush1.msra.mxu0 0.0
    %363 = vmatprep.subr.mxu0 0.0
    %364 = vmatpush1.msra.mxu0 0.0
    %365 = vmatprep.subr.mxu0 0.0
    %366 = vmatpush1.msra.mxu0 0.0
    %367 = vmatprep.subr.mxu0 0.0
    %368 = vmatpush1.msra.mxu0 0.0
    %369 = vmatprep.subr.mxu0 0.0
    %370 = vmatpush1.msra.mxu0 0.0
    %371 = vmatprep.subr.mxu0 0.0
    %372 = vmatpush1.msra.mxu0 0.0
    %373 = vmatprep.subr.mxu0 0.0
    %374 = vmatpush1.msra.mxu0 0.0
    %375 = vmatprep.subr.mxu0 0.0
    %376 = vmatpush1.msra.mxu0 0.0
    %377 = vmatprep.subr.mxu0 0.0
    %378 = vmatpush1.msra.mxu0 0.0
    %379 = vmatprep.subr.mxu0 0.0
    %380 = vmatpush1.msra.mxu0 0.0
    %381 = vmatprep.subr.mxu0 0.0
    %382 = vmatpush1.msra.mxu0 0.0
    %383 = vmatprep.subr.mxu0 0.0
    %384 = vmatpush1.msra.mxu0 0.0
    %385 = vmatprep.subr.mxu0 0.0
    %386 = vmatpush1.msra.mxu0 0.0
    %387 = vmatprep.subr.mxu0 0.0
    %388 = vmatpush1.msra.mxu0 0.0
    %389 = vmatprep.subr.mxu0 0.0
    %390 = vmatpush1.msra.mxu0 0.0
    %391 = vmatprep.subr.mxu0 0.0
    %392 = vmatpush1.msra.mxu0 0.0
    %393 = vmatprep.subr.mxu0 0.0
    %394 = vmatpush1.msra.mxu0 0.0
    %395 = vmatprep.subr.mxu0 0.0
    %396 = vmatpush1.msra.mxu0 0.0
    %397 = vmatprep.subr.mxu0 0.0
    %398 = vmatpush1.msra.mxu0 0.0
    %399 = vmatprep.subr.mxu0 0.0
    %400 = vmatpush1.msra.mxu0 0.0
    %401 = vmatprep.subr.mxu0 0.0
    %402 = vmatpush1.msra.mxu0 0.0
    %403 = vmatprep.subr.mxu0 0.0
    %404 = vmatpush1.msra.mxu0 0.0
    %405 = vmatprep.subr.mxu0 0.0
    %406 = vmatpush1.msra.mxu0 0.0
    %407 = vmatprep.subr.mxu0 0.0
    %408 = vmatpush1.msra.mxu0 0.0
    %409 = vmatprep.subr.mxu0 0.0
    %410 = vmatpush1.msra.mxu0 0.0
    %411 = vmatprep.subr.mxu0 0.0
    %412 = vmatpush1.msra.mxu0 0.0
    %413 = vmatprep.subr.mxu0 0.0
    %414 = vmatpush1.msra.mxu0 0.0
    %415 = vmatprep.subr.mxu0 0.0
    %416 = vmatpush1.msra.mxu0 0.0
    %417 = vmatprep.subr.mxu0 0.0
    %418 = vmatpush1.msra.mxu0 0.0
    %419 = vmatprep.subr.mxu0 0.0
    %420 = vmatpush1.msra.mxu0 0.0
    %421 = vmatprep.mubr.f32.mxu0 0.0
    %422 = vmatmul.mubr.f32.gmra.mrb[0].mxu0 %v355
    %v423 = vpop.f32.mrb[0].mxu0
    %v424 = vadd.f32 0.0, %v423
    %v425 = vpop.f32.mrb[0].mxu0
    %426 = vdwg.mxu0
    %v427 = vld [vmem:[%s6] sm:$0xff]
    %v428 = vld [vmem:[%s6 + $0x8] sm:$0xff]
    %v429 = vld [vmem:[%s6 + $0x10] sm:$0xff]
    %v430 = vld [vmem:[%s6 + $0x18] sm:$0xff]
    %v431 = vld [vmem:[%s7] sm:$0xff]
    %v432 = vld [vmem:[%s7 + $0x8] sm:$0xff]
    %v433 = vld [vmem:[%s7 + $0x10] sm:$0xff]
    %v434 = vld [vmem:[%s7 + $0x18] sm:$0xff]
    %v437 = vrot.slane %v424, 7
    %vm438 = vcmask 1041409
    %v439 = vsel %vm438, %v437, %v352
    %v440 = vsel %vm89, %v439, 0
    %442 = vmatprep.subr.mxu0 0.0
    %443 = vmatpush1.msra.mxu0 %v431
    %444 = vmatprep.subr.mxu0 0.0
    %445 = vmatpush1.msra.mxu0 %v432
    %446 = vmatprep.subr.mxu0 0.0
    %447 = vmatpush1.msra.mxu0 %v433
    %448 = vmatprep.subr.mxu0 0.0
    %449 = vmatpush1.msra.mxu0 %v434
    %450 = vmatprep.subr.mxu0 0.0
    %451 = vmatpush1.msra.mxu0 0.0
    %452 = vmatprep.subr.mxu0 0.0
    %453 = vmatpush1.msra.mxu0 0.0
    %454 = vmatprep.subr.mxu0 0.0
    %455 = vmatpush1.msra.mxu0 0.0
    %456 = vmatprep.subr.mxu0 0.0
    %457 = vmatpush1.msra.mxu0 0.0
    %458 = vmatprep.subr.mxu0 0.0
    %459 = vmatpush1.msra.mxu0 0.0
    %460 = vmatprep.subr.mxu0 0.0
    %461 = vmatpush1.msra.mxu0 0.0
    %462 = vmatprep.subr.mxu0 0.0
    %463 = vmatpush1.msra.mxu0 0.0
    %464 = vmatprep.subr.mxu0 0.0
    %465 = vmatpush1.msra.mxu0 0.0
    %466 = vmatprep.subr.mxu0 0.0
    %467 = vmatpush1.msra.mxu0 0.0
    %468 = vmatprep.subr.mxu0 0.0
    %469 = vmatpush1.msra.mxu0 0.0
    %470 = vmatprep.subr.mxu0 0.0
    %471 = vmatpush1.msra.mxu0 0.0
    %472 = vmatprep.subr.mxu0 0.0
    %473 = vmatpush1.msra.mxu0 0.0
    %474 = vmatprep.subr.mxu0 0.0
    %475 = vmatpush1.msra.mxu0 0.0
    %476 = vmatprep.subr.mxu0 0.0
    %477 = vmatpush1.msra.mxu0 0.0
    %478 = vmatprep.subr.mxu0 0.0
    %479 = vmatpush1.msra.mxu0 0.0
    %480 = vmatprep.subr.mxu0 0.0
    %481 = vmatpush1.msra.mxu0 0.0
    %482 = vmatprep.subr.mxu0 0.0
    %483 = vmatpush1.msra.mxu0 0.0
    %484 = vmatprep.subr.mxu0 0.0
    %485 = vmatpush1.msra.mxu0 0.0
    %486 = vmatprep.subr.mxu0 0.0
    %487 = vmatpush1.msra.mxu0 0.0
    %488 = vmatprep.subr.mxu0 0.0
    %489 = vmatpush1.msra.mxu0 0.0
    %490 = vmatprep.subr.mxu0 0.0
    %491 = vmatpush1.msra.mxu0 0.0
    %492 = vmatprep.subr.mxu0 0.0
    %493 = vmatpush1.msra.mxu0 0.0
    %494 = vmatprep.subr.mxu0 0.0
    %495 = vmatpush1.msra.mxu0 0.0
    %496 = vmatprep.subr.mxu0 0.0
    %497 = vmatpush1.msra.mxu0 0.0
    %498 = vmatprep.subr.mxu0 0.0
    %499 = vmatpush1.msra.mxu0 0.0
    %500 = vmatprep.subr.mxu0 0.0
    %501 = vmatpush1.msra.mxu0 0.0
    %502 = vmatprep.subr.mxu0 0.0
    %503 = vmatpush1.msra.mxu0 0.0
    %504 = vmatprep.subr.mxu0 0.0
    %505 = vmatpush1.msra.mxu0 0.0
    %506 = vmatprep.mubr.f32.mxu0 0.0
    %507 = vmatmul.mubr.f32.gmra.mrb[0].mxu0 %v440
    %v508 = vpop.f32.mrb[0].mxu0
    %v509 = vadd.f32 0.0, %v508
    %v510 = vpop.f32.mrb[0].mxu0
    %511 = vdwg.mxu0
    %512 = vmatprep.subr.mxu0 0.0
    %513 = vmatpush1.msra.mxu0 %v427
    %514 = vmatprep.subr.mxu0 0.0
    %515 = vmatpush1.msra.mxu0 %v428
    %516 = vmatprep.subr.mxu0 0.0
    %517 = vmatpush1.msra.mxu0 %v429
    %518 = vmatprep.subr.mxu0 0.0
    %519 = vmatpush1.msra.mxu0 %v430
    %520 = vmatprep.subr.mxu0 0.0
    %521 = vmatpush1.msra.mxu0 0.0
    %522 = vmatprep.subr.mxu0 0.0
    %523 = vmatpush1.msra.mxu0 0.0
    %524 = vmatprep.subr.mxu0 0.0
    %525 = vmatpush1.msra.mxu0 0.0
    %526 = vmatprep.subr.mxu0 0.0
    %527 = vmatpush1.msra.mxu0 0.0
    %528 = vmatprep.subr.mxu0 0.0
    %529 = vmatpush1.msra.mxu0 0.0
    %530 = vmatprep.subr.mxu0 0.0
    %531 = vmatpush1.msra.mxu0 0.0
    %532 = vmatprep.subr.mxu0 0.0
    %533 = vmatpush1.msra.mxu0 0.0
    %534 = vmatprep.subr.mxu0 0.0
    %535 = vmatpush1.msra.mxu0 0.0
    %536 = vmatprep.subr.mxu0 0.0
    %537 = vmatpush1.msra.mxu0 0.0
    %538 = vmatprep.subr.mxu0 0.0
    %539 = vmatpush1.msra.mxu0 0.0
    %540 = vmatprep.subr.mxu0 0.0
    %541 = vmatpush1.msra.mxu0 0.0
    %542 = vmatprep.subr.mxu0 0.0
    %543 = vmatpush1.msra.mxu0 0.0
    %544 = vmatprep.subr.mxu0 0.0
    %545 = vmatpush1.msra.mxu0 0.0
    %546 = vmatprep.subr.mxu0 0.0
    %547 = vmatpush1.msra.mxu0 0.0
    %548 = vmatprep.subr.mxu0 0.0
    %549 = vmatpush1.msra.mxu0 0.0
    %550 = vmatprep.subr.mxu0 0.0
    %551 = vmatpush1.msra.mxu0 0.0
    %552 = vmatprep.subr.mxu0 0.0
    %553 = vmatpush1.msra.mxu0 0.0
    %554 = vmatprep.subr.mxu0 0.0
    %555 = vmatpush1.msra.mxu0 0.0
    %556 = vmatprep.subr.mxu0 0.0
    %557 = vmatpush1.msra.mxu0 0.0
    %558 = vmatprep.subr.mxu0 0.0
    %559 = vmatpush1.msra.mxu0 0.0
    %560 = vmatprep.subr.mxu0 0.0
    %561 = vmatpush1.msra.mxu0 0.0
    %562 = vmatprep.subr.mxu0 0.0
    %563 = vmatpush1.msra.mxu0 0.0
    %564 = vmatprep.subr.mxu0 0.0
    %565 = vmatpush1.msra.mxu0 0.0
    %566 = vmatprep.subr.mxu0 0.0
    %567 = vmatpush1.msra.mxu0 0.0
    %568 = vmatprep.subr.mxu0 0.0
    %569 = vmatpush1.msra.mxu0 0.0
    %570 = vmatprep.subr.mxu0 0.0
    %571 = vmatpush1.msra.mxu0 0.0
    %572 = vmatprep.subr.mxu0 0.0
    %573 = vmatpush1.msra.mxu0 0.0
    %574 = vmatprep.subr.mxu0 0.0
    %575 = vmatpush1.msra.mxu0 0.0
    %576 = vmatprep.mubr.f32.mxu0 0.0
    %577 = vmatmul.mubr.f32.gmra.mrb[0].mxu0 %v164
    %v578 = vpop.f32.mrb[0].mxu0
    %v579 = vadd.f32 %v509, %v578
    %v580 = vpop.f32.mrb[0].mxu0
    %581 = vdwg.mxu0
    %v582 = vld [vmem:[%s8] sm:$0x1]
    %v584 = vlaneseq
    %v585 = vshrl.u32 %v584, 7
    %v586 = vsub.s32 0, %v585
    %v587 = vrot.slane %v582, %v586
    %v589 = vadd.f32 %v579, %v587
    %v590 = vmax.f32 %v589, 0.0
    %v591 = vld [vmem:[%s9] sm:$0xff]
    %v592 = vld [vmem:[%s9 + $0x8] sm:$0xff]
    %v593 = vld [vmem:[%s9 + $0x10] sm:$0xff]
    %v594 = vld [vmem:[%s9 + $0x18] sm:$0xff]
    %v595 = vld [vmem:[%s11] sm:$0x1]
    %v597 = vlaneseq
    %v598 = vshrl.u32 %v597, 7
    %v599 = vsub.s32 0, %v598
    %v600 = vrot.slane %v595, %v599
    %v603 = vsel %vm89, %v590, 0
    %605 = vmatprep.subr.mxu0 0.0
    %606 = vmatpush1.msra.mxu0 %v591
    %607 = vmatprep.subr.mxu0 0.0
    %608 = vmatpush1.msra.mxu0 %v592
    %609 = vmatprep.subr.mxu0 0.0
    %610 = vmatpush1.msra.mxu0 %v593
    %611 = vmatprep.subr.mxu0 0.0
    %612 = vmatpush1.msra.mxu0 %v594
    %613 = vmatprep.subr.mxu0 0.0
    %614 = vmatpush1.msra.mxu0 0.0
    %615 = vmatprep.subr.mxu0 0.0
    %616 = vmatpush1.msra.mxu0 0.0
    %617 = vmatprep.subr.mxu0 0.0
    %618 = vmatpush1.msra.mxu0 0.0
    %619 = vmatprep.subr.mxu0 0.0
    %620 = vmatpush1.msra.mxu0 0.0
    %621 = vmatprep.subr.mxu0 0.0
    %622 = vmatpush1.msra.mxu0 0.0
    %623 = vmatprep.subr.mxu0 0.0
    %624 = vmatpush1.msra.mxu0 0.0
    %625 = vmatprep.subr.mxu0 0.0
    %626 = vmatpush1.msra.mxu0 0.0
    %627 = vmatprep.subr.mxu0 0.0
    %628 = vmatpush1.msra.mxu0 0.0
    %629 = vmatprep.subr.mxu0 0.0
    %630 = vmatpush1.msra.mxu0 0.0
    %631 = vmatprep.subr.mxu0 0.0
    %632 = vmatpush1.msra.mxu0 0.0
    %633 = vmatprep.subr.mxu0 0.0
    %634 = vmatpush1.msra.mxu0 0.0
    %635 = vmatprep.subr.mxu0 0.0
    %636 = vmatpush1.msra.mxu0 0.0
    %637 = vmatprep.subr.mxu0 0.0
    %638 = vmatpush1.msra.mxu0 0.0
    %639 = vmatprep.subr.mxu0 0.0
    %640 = vmatpush1.msra.mxu0 0.0
    %641 = vmatprep.subr.mxu0 0.0
    %642 = vmatpush1.msra.mxu0 0.0
    %643 = vmatprep.subr.mxu0 0.0
    %644 = vmatpush1.msra.mxu0 0.0
    %645 = vmatprep.subr.mxu0 0.0
    %646 = vmatpush1.msra.mxu0 0.0
    %647 = vmatprep.subr.mxu0 0.0
    %648 = vmatpush1.msra.mxu0 0.0
    %649 = vmatprep.subr.mxu0 0.0
    %650 = vmatpush1.msra.mxu0 0.0
    %651 = vmatprep.subr.mxu0 0.0
    %652 = vmatpush1.msra.mxu0 0.0
    %653 = vmatprep.subr.mxu0 0.0
    %654 = vmatpush1.msra.mxu0 0.0
    %655 = vmatprep.subr.mxu0 0.0
    %656 = vmatpush1.msra.mxu0 0.0
    %657 = vmatprep.subr.mxu0 0.0
    %658 = vmatpush1.msra.mxu0 0.0
    %659 = vmatprep.subr.mxu0 0.0
    %660 = vmatpush1.msra.mxu0 0.0
    %661 = vmatprep.subr.mxu0 0.0
    %662 = vmatpush1.msra.mxu0 0.0
    %663 = vmatprep.subr.mxu0 0.0
    %664 = vmatpush1.msra.mxu0 0.0
    %665 = vmatprep.subr.mxu0 0.0
    %666 = vmatpush1.msra.mxu0 0.0
    %667 = vmatprep.subr.mxu0 0.0
    %668 = vmatpush1.msra.mxu0 0.0
    %669 = vmatprep.mubr.f32.mxu0 0.0
    %670 = vmatmul.mubr.f32.gmra.mrb[0].mxu0 %v603
    %v671 = vpop.f32.mrb[0].mxu0
    %v672 = vadd.f32 %v600, %v671
    %v673 = vpop.f32.mrb[0].mxu0
    %674 = vdwg.mxu0
    %v675 = vld [vmem:[%s10] sm:$0xff]
    %v676 = vld [vmem:[%s10 + $0x8] sm:$0xff]
    %v677 = vld [vmem:[%s10 + $0x10] sm:$0xff]
    %v678 = vld [vmem:[%s10 + $0x18] sm:$0xff]
    %v679 = vld [vmem:[#allocation5] sm:$0x1]
    %v681 = vlaneseq
    %v682 = vshrl.u32 %v681, 7
    %v683 = vsub.s32 0, %v682
    %v684 = vrot.slane %v679, %v683
    %686 = vmatprep.subr.mxu0 0.0
    %687 = vmatpush1.msra.mxu0 %v675
    %688 = vmatprep.subr.mxu0 0.0
    %689 = vmatpush1.msra.mxu0 %v676
    %690 = vmatprep.subr.mxu0 0.0
    %691 = vmatpush1.msra.mxu0 %v677
    %692 = vmatprep.subr.mxu0 0.0
    %693 = vmatpush1.msra.mxu0 %v678
    %694 = vmatprep.subr.mxu0 0.0
    %695 = vmatpush1.msra.mxu0 0.0
    %696 = vmatprep.subr.mxu0 0.0
    %697 = vmatpush1.msra.mxu0 0.0
    %698 = vmatprep.subr.mxu0 0.0
    %699 = vmatpush1.msra.mxu0 0.0
    %700 = vmatprep.subr.mxu0 0.0
    %701 = vmatpush1.msra.mxu0 0.0
    %702 = vmatprep.subr.mxu0 0.0
    %703 = vmatpush1.msra.mxu0 0.0
    %704 = vmatprep.subr.mxu0 0.0
    %705 = vmatpush1.msra.mxu0 0.0
    %706 = vmatprep.subr.mxu0 0.0
    %707 = vmatpush1.msra.mxu0 0.0
    %708 = vmatprep.subr.mxu0 0.0
    %709 = vmatpush1.msra.mxu0 0.0
    %710 = vmatprep.subr.mxu0 0.0
    %711 = vmatpush1.msra.mxu0 0.0
    %712 = vmatprep.subr.mxu0 0.0
    %713 = vmatpush1.msra.mxu0 0.0
    %714 = vmatprep.subr.mxu0 0.0
    %715 = vmatpush1.msra.mxu0 0.0
    %716 = vmatprep.subr.mxu0 0.0
    %717 = vmatpush1.msra.mxu0 0.0
    %718 = vmatprep.subr.mxu0 0.0
    %719 = vmatpush1.msra.mxu0 0.0
    %720 = vmatprep.subr.mxu0 0.0
    %721 = vmatpush1.msra.mxu0 0.0
    %722 = vmatprep.subr.mxu0 0.0
    %723 = vmatpush1.msra.mxu0 0.0
    %724 = vmatprep.subr.mxu0 0.0
    %725 = vmatpush1.msra.mxu0 0.0
    %726 = vmatprep.subr.mxu0 0.0
    %727 = vmatpush1.msra.mxu0 0.0
    %728 = vmatprep.subr.mxu0 0.0
    %729 = vmatpush1.msra.mxu0 0.0
    %730 = vmatprep.subr.mxu0 0.0
    %731 = vmatpush1.msra.mxu0 0.0
    %732 = vmatprep.subr.mxu0 0.0
    %733 = vmatpush1.msra.mxu0 0.0
    %734 = vmatprep.subr.mxu0 0.0
    %735 = vmatpush1.msra.mxu0 0.0
    %736 = vmatprep.subr.mxu0 0.0
    %737 = vmatpush1.msra.mxu0 0.0
    %738 = vmatprep.subr.mxu0 0.0
    %739 = vmatpush1.msra.mxu0 0.0
    %740 = vmatprep.subr.mxu0 0.0
    %741 = vmatpush1.msra.mxu0 0.0
    %742 = vmatprep.subr.mxu0 0.0
    %743 = vmatpush1.msra.mxu0 0.0
    %744 = vmatprep.subr.mxu0 0.0
    %745 = vmatpush1.msra.mxu0 0.0
    %746 = vmatprep.subr.mxu0 0.0
    %747 = vmatpush1.msra.mxu0 0.0
    %748 = vmatprep.subr.mxu0 0.0
    %749 = vmatpush1.msra.mxu0 0.0
    %750 = vmatprep.mubr.f32.mxu0 0.0
    %751 = vmatmul.mubr.f32.gmra.mrb[0].mxu0 %v91
    %v752 = vpop.f32.mrb[0].mxu0
    %v753 = vadd.f32 %v684, %v752
    %v754 = vpop.f32.mrb[0].mxu0
    %755 = vdwg.mxu0
    %v756 = vadd.f32 %v672, %v753
    %v757 = vxor.u32 %v756, 2147483648
    %v758 = vmul.f32 %v757, 1.442695
    %v759 = vpow.pop %v758
    %v760 = vadd.f32 %v759, 1.0
    %v761 = vrcp.pop %v760
    %v762 = vmul.f32 1.0, %v761
    %764 = vrot.lane.b32.xlu0 %v753, 64
    %v765 = vpop.permute.xlu0 %764
    %v767 = vmul.f32 %v762, %v765
    %769 = vrot.lane.b32.xlu0 %v767, 64
    %v770 = vpop.permute.xlu0 %769
    %v772 = vadd.f32 %v672, %v770
    %v773 = vtanh.pop %v772
    %v774 = vsub.f32 1.0, %v762
    %776 = vrot.lane.b32.xlu0 %v773, 96
    %v777 = vpop.permute.xlu0 %776
    %v779 = vmul.f32 %v774, %v777
    %780 = vrot.lane.b32.xlu0 %v80, 32
    %v781 = vpop.permute.xlu0 %780
    %v783 = vmul.f32 %v762, %v781
    %v784 = vadd.f32 %v779, %v783
    %786 = vrot.lane.b32.xlu0 %v784, 96
    %v787 = vpop.permute.xlu0 %786
    %vm789 = vcmask 254976
    %790 = vst.msk [vmem:[#allocation8] sm:$0x3] %vm789, %v787
    %v791 = vld [vmem:[%s13] sm:$0xff]
    %v792 = vld [vmem:[%s13 + $0x8] sm:$0xff]
    %v793 = vld [vmem:[%s13 + $0x10] sm:$0xff]
    %v794 = vld [vmem:[%s13 + $0x18] sm:$0xff]
    %v795 = vld [vmem:[%s14] sm:$0x1]
    %v797 = vlaneseq
    %v798 = vshrl.u32 %v797, 7
    %v799 = vsub.s32 0, %v798
    %v800 = vrot.slane %v795, %v799
    %v802 = vsel %vm89, %v787, 0
    %804 = vmatprep.subr.mxu0 0.0
    %805 = vmatpush1.msra.mxu0 %v791
    %806 = vmatprep.subr.mxu0 0.0
    %807 = vmatpush1.msra.mxu0 %v792
    %808 = vmatprep.subr.mxu0 0.0
    %809 = vmatpush1.msra.mxu0 %v793
    %810 = vmatprep.subr.mxu0 0.0
    %811 = vmatpush1.msra.mxu0 %v794
    %812 = vmatprep.subr.mxu0 0.0
    %813 = vmatpush1.msra.mxu0 0.0
    %814 = vmatprep.subr.mxu0 0.0
    %815 = vmatpush1.msra.mxu0 0.0
    %816 = vmatprep.subr.mxu0 0.0
    %817 = vmatpush1.msra.mxu0 0.0
    %818 = vmatprep.subr.mxu0 0.0
    %819 = vmatpush1.msra.mxu0 0.0
    %820 = vmatprep.subr.mxu0 0.0
    %821 = vmatpush1.msra.mxu0 0.0
    %822 = vmatprep.subr.mxu0 0.0
    %823 = vmatpush1.msra.mxu0 0.0
    %824 = vmatprep.subr.mxu0 0.0
    %825 = vmatpush1.msra.mxu0 0.0
    %826 = vmatprep.subr.mxu0 0.0
    %827 = vmatpush1.msra.mxu0 0.0
    %828 = vmatprep.subr.mxu0 0.0
    %829 = vmatpush1.msra.mxu0 0.0
    %830 = vmatprep.subr.mxu0 0.0
    %831 = vmatpush1.msra.mxu0 0.0
    %832 = vmatprep.subr.mxu0 0.0
    %833 = vmatpush1.msra.mxu0 0.0
    %834 = vmatprep.subr.mxu0 0.0
    %835 = vmatpush1.msra.mxu0 0.0
    %836 = vmatprep.subr.mxu0 0.0
    %837 = vmatpush1.msra.mxu0 0.0
    %838 = vmatprep.subr.mxu0 0.0
    %839 = vmatpush1.msra.mxu0 0.0
    %840 = vmatprep.subr.mxu0 0.0
    %841 = vmatpush1.msra.mxu0 0.0
    %842 = vmatprep.subr.mxu0 0.0
    %843 = vmatpush1.msra.mxu0 0.0
    %844 = vmatprep.subr.mxu0 0.0
    %845 = vmatpush1.msra.mxu0 0.0
    %846 = vmatprep.subr.mxu0 0.0
    %847 = vmatpush1.msra.mxu0 0.0
    %848 = vmatprep.subr.mxu0 0.0
    %849 = vmatpush1.msra.mxu0 0.0
    %850 = vmatprep.subr.mxu0 0.0
    %851 = vmatpush1.msra.mxu0 0.0
    %852 = vmatprep.subr.mxu0 0.0
    %853 = vmatpush1.msra.mxu0 0.0
    %854 = vmatprep.subr.mxu0 0.0
    %855 = vmatpush1.msra.mxu0 0.0
    %856 = vmatprep.subr.mxu0 0.0
    %857 = vmatpush1.msra.mxu0 0.0
    %858 = vmatprep.subr.mxu0 0.0
    %859 = vmatpush1.msra.mxu0 0.0
    %860 = vmatprep.subr.mxu0 0.0
    %861 = vmatpush1.msra.mxu0 0.0
    %862 = vmatprep.subr.mxu0 0.0
    %863 = vmatpush1.msra.mxu0 0.0
    %864 = vmatprep.subr.mxu0 0.0
    %865 = vmatpush1.msra.mxu0 0.0
    %866 = vmatprep.subr.mxu0 0.0
    %867 = vmatpush1.msra.mxu0 0.0
    %868 = vmatprep.mubr.f32.mxu0 0.0
    %869 = vmatmul.mubr.f32.gmra.mrb[0].mxu0 %v802
    %v870 = vpop.f32.mrb[0].mxu0
    %v871 = vadd.f32 %v800, %v870
    %v872 = vpop.f32.mrb[0].mxu0
    %873 = vdwg.mxu0
    %vm874 = vcmask 123904
    %v875 = vsel %vm874, %v871, -inf
    %876 = vmax.xlane.f32.xlu0 %v875
    %v877 = vpop.xlane.xlu0 %876
    %v878 = vsub.f32 %v871, %v877
    %v879 = vmul.f32 %v878, 1.442695
    %v880 = vpow.pop %v879
    %v881 = vsel %vm874, %v880, 0.0
    %882 = vadd.xlane.f32.xlu0 %v881
    %v883 = vpop.xlane.xlu0 %882
    %v884 = vlog2.pop %v883
    %v885 = vmul.f32 %v884, 0.6931472
    %v886 = vsub.f32 %v878, %v885
    %887 = vst.msk [vmem:[#allocation7] sm:$0x3] %vm874, %v886
    // Predicated region
    $region70: #{fwd.1} parent=1 // pred_check
      _
    $region71: #{fwd.1} parent=1 // pred_check_branch
      %889 = sbr.rel (0) target = $region73
    $region72: #{fwd.1} parent=1 // pred_region
      %s891 = ssub.s32 32, 32
      %892 = vsyncadd [#allocation4], %s891
      %s894 = sshll.u32 [#allocation7], 4
      %s895 = int_to_ptr.vmem [resolvable:$true] %s894
      %897 = dma.vmem_to_hbm [thread:$0]  %s895, 32, %s15, [#allocation4]
    $region73: #{fwd.1} parent=1 // pred_fallthru
      _
    // Predicated region
    $region74: #{fwd.1} parent=1 // pred_check
      _
    $region75: #{fwd.1} parent=1 // pred_check_branch
      %899 = sbr.rel (0) target = $region77
    $region76: #{fwd.1} parent=1 // pred_region
      %s901 = ssub.s32 32, 32
      %902 = vsyncadd [#allocation9], %s901
      %s904 = sshll.u32 [#allocation8], 4
      %s905 = int_to_ptr.vmem [resolvable:$true] %s904
      %907 = dma.vmem_to_hbm [thread:$0]  %s905, 32, %s16, [#allocation9]
    $region77: #{fwd.1} parent=1 // pred_fallthru
      _
    // Predicated region
    $region78: #{fwd.1} parent=1 // pred_check
      _
    $region79: #{fwd.1} parent=1 // pred_check_branch
      %909 = sbr.rel (0) target = $region81
    $region80: #{fwd.1} parent=1 // pred_region
      %s911 = ssub.s32 32, 32
      %912 = vsyncadd [#allocation9], %s911
      %s914 = sshll.u32 [#allocation10], 4
      %s915 = int_to_ptr.vmem [resolvable:$true] %s914
      %917 = dma.vmem_to_hbm [thread:$0]  %s915, 32, %s17, [#allocation9]
    $region81: #{fwd.1} parent=1 // pred_fallthru
      _
    // Predicated region
    $region82: #{fwd.1} parent=1 // pred_check
      _
    $region83: #{fwd.1} parent=1 // pred_check_branch
      %919 = sbr.rel (0) target = $region85
    $region84: #{fwd.1} parent=1 // pred_region
      %920 = dma.done [#allocation4], 32
    $region85: #{fwd.1} parent=1 // pred_fallthru
      _
    // Predicated region
    $region86: #{fwd.1} parent=1 // pred_check
      _
    $region87: #{fwd.1} parent=1 // pred_check_branch
      %922 = sbr.rel (0) target = $region89
    $region88: #{fwd.1} parent=1 // pred_region
      %923 = dma.done [#allocation9], 32
    $region89: #{fwd.1} parent=1 // pred_fallthru
      _
    // Predicated region
    $region90: #{fwd.1} parent=1 // pred_check
      _
    $region91: #{fwd.1} parent=1 // pred_check_branch
      %925 = sbr.rel (0) target = $region93
    $region92: #{fwd.1} parent=1 // pred_region
      %926 = dma.done [#allocation9], 32
    $region93: #{fwd.1} parent=1 // pred_fallthru
      _
    %927 = vsyncpa [#allocation3], 1
    %928 = vsyncpa [#allocation6], 1
    %929 = vsyncpa [#allocation4], 1
    %930 = vsyncpa [#allocation9], 1

</llo_original>
